<compile_context>
chip_gen: v7x
topology: tpu7x:2x2x1
jax: 0.10.0
libtpu: 0.0.40
codegen_flags: <defaults>
</compile_context>

<pallas_src>
import functools

import jax
import jax.numpy as jnp
from jax.experimental import pallas as pl
from jax.experimental.pallas import tpu as pltpu


def _sar_ce_kernel(logits_ref, targets_ref, out_ref, *, ignore_index, n_rows,
                   tile_rows):
    # logits_ref : [TN, C]  float block (VMEM)
    # targets_ref: [TN, 1]  int32 block (VMEM)
    # out_ref    : [1, 2]   f32 per-tile partial (SMEM): [sum, count]
    i = pl.program_id(0)

    x = logits_ref[...].astype(jnp.float32)             # [TN, C]
    t = targets_ref[...]                                 # [TN, 1] int32
    tn, c = x.shape

    # Row validity: inside the real row range AND not the ignore index.
    # (The padded last timestep carries ignore_index, so it drops out here,
    #  exactly matching predict[:, :-1] / label[:, 1:].)
    row = jax.lax.broadcasted_iota(jnp.int32, (tn, 1), 0)
    in_range = (i * tile_rows + row) < n_rows
    valid = jnp.logical_and(t != ignore_index, in_range)     # [TN, 1] bool

    # Single shifted sweep: reuse (x - m) for both exp-sum and target gather.
    m = jnp.max(x, axis=-1, keepdims=True)                    # [TN, 1]
    xs = x - m                                                 # [TN, C]
    sum_e = jnp.sum(jnp.exp(xs), axis=-1, keepdims=True)       # [TN, 1]
    col = jax.lax.broadcasted_iota(jnp.int32, (tn, c), 1)      # [TN, C]
    picked = jnp.sum(jnp.where(col == t, xs, 0.0), axis=-1,
                     keepdims=True)                            # x[t] - m
    per_row = jnp.where(valid, jnp.log(sum_e) - picked, 0.0)   # [TN, 1]

    out_ref[0, 0] = jnp.sum(per_row)
    out_ref[0, 1] = jnp.sum(valid.astype(jnp.float32))


def _choose_tile_rows(n_rows, num_classes, itemsize):
    """Largest row tile (multiple of 8, capped at 2048) fitting ~4 MiB/buffer.

    Accounts for both the logits row (C padded to 128 lanes) and the int32
    target row (lane-padded to 128 in VMEM)."""
    c_pad = max(((num_classes + 127) // 128) * 128, 128)
    budget = 4 * 1024 * 1024
    per_row_bytes = c_pad * itemsize + 128 * 4
    tn = budget // per_row_bytes
    tn = max(8, min(2048, (tn // 8) * 8))
    return min(tn, n_rows)


def sar_loss(predicts, labels, *, ignore_index=92, tile_rows=None):
    """predicts: [B, T, C] float; labels: [B, T] int. Returns {'loss': scalar}."""
    b, t, c = predicts.shape
    assert labels.shape == (b, t)
    n = b * t

    # Shift labels left by one; pad the final step with ignore_index so that
    # row (b, s) of the *full* logits pairs with label[b, s+1] and the last
    # timestep is automatically excluded — no slice/copy of the logits needed.
    shifted = jnp.concatenate(
        [labels.astype(jnp.int32)[:, 1:],
         jnp.full((b, 1), ignore_index, dtype=jnp.int32)],
        axis=1)                                            # [B, T] (tiny)

    logits = predicts.reshape(n, c)        # contiguous merge of leading dims
    targets = shifted.reshape(n, 1)        # [N, 1] int32

    if tile_rows is None:
        tn = _choose_tile_rows(n, c, jnp.dtype(predicts.dtype).itemsize)
    else:
        tn = min(int(tile_rows), n)
        if tn < n and tn % 8 != 0:
            tn = max(8, (tn // 8) * 8)
    grid = pl.cdiv(n, tn)

    kernel = functools.partial(
        _sar_ce_kernel, ignore_index=ignore_index, n_rows=n, tile_rows=tn)

    partials = pl.pallas_call(
        kernel,
        out_shape=jax.ShapeDtypeStruct((grid, 2), jnp.float32),
        grid=(grid,),
        in_specs=[
            pl.BlockSpec((tn, c), lambda i: (i, 0)),    # logits tile
            pl.BlockSpec((tn, 1), lambda i: (i, 0)),    # targets tile
        ],
        out_specs=pl.BlockSpec((1, 2), lambda i: (i, 0),
                               memory_space=pltpu.MemorySpace.SMEM),
        compiler_params=pltpu.CompilerParams(
            dimension_semantics=("parallel",)),
    )(logits, targets)

    total = jnp.sum(partials[:, 0])
    count = jnp.sum(partials[:, 1])
    # 0/0 -> NaN when every target equals ignore_index (matches PyTorch).
    return {"loss": total / count}


def _reference_loss(predicts, labels, ignore_index=92):
    # Pure-JAX reference of nn.CrossEntropyLoss(ignore_index=...)
    predict = predicts[:, :-1, :].astype(jnp.float32)
    label = labels.astype(jnp.int32)[:, 1:]
    x = predict.reshape(-1, predict.shape[-1])
    tt = label.reshape(-1)
    logz = jax.scipy.special.logsumexp(x, axis=-1)
    picked = jnp.take_along_axis(
        x, jnp.clip(tt, 0, x.shape[-1] - 1)[:, None], axis=-1)[:, 0]
    valid = tt != ignore_index
    per = jnp.where(valid, logz - picked, 0.0)
    return jnp.sum(per) / jnp.sum(valid.astype(jnp.float32))


if __name__ == "__main__":
    key = jax.random.PRNGKey(0)
    k1, k2, k3, k4 = jax.random.split(key, 4)

    # Case 1: module-typical small shape (single tile).
    B, T, C = 2, 9, 96
    predicts = jax.random.normal(k1, (B, T, C), dtype=jnp.float32)
    labels = jax.random.randint(k2, (B, T), 0, C, dtype=jnp.int32)
    labels = labels.at[0, 3].set(92).at[1, 5].set(92)   # some ignored positions
    out = sar_loss(predicts, labels)
    loss = jax.block_until_ready(out["loss"])
    ref = _reference_loss(predicts, labels)
    assert jnp.allclose(loss, ref, rtol=1e-5, atol=1e-5), (loss, ref)

    # Case 2: exercise the multi-tile grid + per-tile partial reduction path
    # (N = 32 rows, tile = 8 -> 4 grid steps, "parallel" axis).
    B2, T2, C2 = 4, 8, 96
    predicts2 = jax.random.normal(k3, (B2, T2, C2), dtype=jnp.float32)
    labels2 = jax.random.randint(k4, (B2, T2), 0, C2, dtype=jnp.int32)
    labels2 = labels2.at[1, 2].set(92)
    out2 = sar_loss(predicts2, labels2, tile_rows=8)
    loss2 = jax.block_until_ready(out2["loss"])
    ref2 = _reference_loss(predicts2, labels2)
    assert jnp.allclose(loss2, ref2, rtol=1e-5, atol=1e-5), (loss2, ref2)

    print("KERNEL_OK")
</pallas_src>

<mosaic_0001>
module attributes {stable_mosaic.version = 11 : i64} {
  func.func @_sar_ce_kernel(%arg0: i32, %arg1: memref<18x96xf32, #tpu.memory_space<vmem>>, %arg2: memref<18x1xi32, #tpu.memory_space<vmem>>, %arg3: memref<1x2xf32, #tpu.memory_space<smem>>) attributes {dimension_semantics = [#tpu.dimension_semantics<parallel>], iteration_bounds = array<i64: 1>, scalar_prefetch = 0 : i64, scratch_operands = 0 : i64, tpu.core_type = #tpu.core_type<tc>, window_params = [{transform_indices = @transform_0, window_bounds = array<i64: 18, 96>}, {transform_indices = @transform_1, window_bounds = array<i64: 18, 1>}, {transform_indices = @transform_2, window_bounds = array<i64: 1, 2>}]} {
    %c0 = arith.constant 0 : index
    %c0_0 = arith.constant 0 : index
    %0 = vector.load %arg1[%c0, %c0_0] : memref<18x96xf32, #tpu.memory_space<vmem>>, vector<18x96xf32>
    %c0_1 = arith.constant 0 : index
    %c0_2 = arith.constant 0 : index
    %1 = vector.load %arg2[%c0_1, %c0_2] : memref<18x1xi32, #tpu.memory_space<vmem>>, vector<18x1xi32>
    %2 = tpu.iota {dimensions = array<i32: 0>} : vector<18x1xi32>
    %c18_i32 = arith.constant 18 : i32
    %3 = arith.muli %arg0, %c18_i32 : i32
    %4 = vector.broadcast %3 : i32 to vector<18x1xi32>
    %5 = arith.addi %4, %2 : vector<18x1xi32>
    %c18_i32_3 = arith.constant 18 : i32
    %6 = vector.broadcast %c18_i32_3 : i32 to vector<18x1xi32>
    %7 = arith.cmpi slt, %5, %6 : vector<18x1xi32>
    %c92_i32 = arith.constant 92 : i32
    %8 = vector.broadcast %c92_i32 : i32 to vector<18x1xi32>
    %9 = arith.cmpi ne, %1, %8 : vector<18x1xi32>
    %10 = arith.andi %9, %7 : vector<18x1xi1>
    %cst = arith.constant dense<0xFF800000> : vector<18xf32>
    %11 = vector.multi_reduction <maximumf>, %0, %cst [1] : vector<18x96xf32> to vector<18xf32>
    %12 = vector.shape_cast %11 : vector<18xf32> to vector<18x1xf32>
    %13 = vector.broadcast %12 : vector<18x1xf32> to vector<18x96xf32>
    %14 = arith.subf %0, %13 : vector<18x96xf32>
    %15 = math.exp %14 : vector<18x96xf32>
    %cst_4 = arith.constant dense<0.000000e+00> : vector<18xf32>
    %16 = vector.multi_reduction <add>, %15, %cst_4 [1] : vector<18x96xf32> to vector<18xf32>
    %17 = vector.shape_cast %16 : vector<18xf32> to vector<18x1xf32>
    %18 = tpu.iota {dimensions = array<i32: 1>} : vector<18x96xi32>
    %19 = vector.broadcast %1 : vector<18x1xi32> to vector<18x96xi32>
    %20 = arith.cmpi eq, %18, %19 : vector<18x96xi32>
    %cst_5 = arith.constant 0.000000e+00 : f32
    %21 = vector.broadcast %cst_5 : f32 to vector<18x96xf32>
    %22 = arith.select %20, %14, %21 : vector<18x96xi1>, vector<18x96xf32>
    %cst_6 = arith.constant dense<0.000000e+00> : vector<18xf32>
    %23 = vector.multi_reduction <add>, %22, %cst_6 [1] : vector<18x96xf32> to vector<18xf32>
    %24 = vector.shape_cast %23 : vector<18xf32> to vector<18x1xf32>
    %25 = math.log %17 : vector<18x1xf32>
    %26 = arith.subf %25, %24 : vector<18x1xf32>
    %cst_7 = arith.constant 0.000000e+00 : f32
    %27 = vector.broadcast %cst_7 : f32 to vector<18x1xf32>
    %28 = arith.select %10, %26, %27 : vector<18x1xi1>, vector<18x1xf32>
    %29 = vector.shape_cast %28 : vector<18x1xf32> to vector<1x18x1xf32>
    %cst_8 = arith.constant dense<0.000000e+00> : vector<1xf32>
    %30 = vector.multi_reduction <add>, %29, %cst_8 [1, 2] : vector<1x18x1xf32> to vector<1xf32>
    %31 = vector.shape_cast %30 : vector<1xf32> to vector<1x1x1xf32>
    %32 = vector.extract %31[0, 0, 0] : f32 from vector<1x1x1xf32>
    %c0_9 = arith.constant 0 : index
    %c0_10 = arith.constant 0 : index
    %33 = memref.load %arg3[%c0_9, %c0_10] : memref<1x2xf32, #tpu.memory_space<smem>>
    memref.store %32, %arg3[%c0_9, %c0_10] : memref<1x2xf32, #tpu.memory_space<smem>>
    %34 = arith.extui %10 : vector<18x1xi1> to vector<18x1xi32>
    %35 = arith.sitofp %34 : vector<18x1xi32> to vector<18x1xf32>
    %36 = vector.shape_cast %35 : vector<18x1xf32> to vector<1x18x1xf32>
    %cst_11 = arith.constant dense<0.000000e+00> : vector<1xf32>
    %37 = vector.multi_reduction <add>, %36, %cst_11 [1, 2] : vector<1x18x1xf32> to vector<1xf32>
    %38 = vector.shape_cast %37 : vector<1xf32> to vector<1x1x1xf32>
    %39 = vector.extract %38[0, 0, 0] : f32 from vector<1x1x1xf32>
    %c0_12 = arith.constant 0 : index
    %c1 = arith.constant 1 : index
    %40 = memref.load %arg3[%c0_12, %c1] : memref<1x2xf32, #tpu.memory_space<smem>>
    memref.store %39, %arg3[%c0_12, %c1] : memref<1x2xf32, #tpu.memory_space<smem>>
    return
  }
  func.func @transform_0(%arg0: i32) -> (i32, i32) {
    %c0_i32 = arith.constant 0 : i32
    %c0_i32_0 = arith.constant 0 : i32
    return %arg0, %c0_i32 : i32, i32
  }
  func.func @transform_1(%arg0: i32) -> (i32, i32) {
    %c0_i32 = arith.constant 0 : i32
    %c0_i32_0 = arith.constant 0 : i32
    return %arg0, %c0_i32 : i32, i32
  }
  func.func @transform_2(%arg0: i32) -> (i32, i32) {
    %c0_i32 = arith.constant 0 : i32
    %c0_i32_0 = arith.constant 0 : i32
    return %arg0, %c0_i32 : i32, i32
  }
}

</mosaic_0001>

<llo_original>
// kernel: tpu_custom_call.1
$region0: #{tpu_custom_call.1}
  #allocation0 [shape = 'u32[]', space=smem, size = 0x4, offset = 0x4, fixed_abs, tag = 'smem constant byte address 0x4 - core index']
  #allocation1 [shape = 'u32[144,128]{1,0:T(1,128)}', space=vmem, size = 0x12000, scoped, tag = 'internal scratch']
  %s0 = inlined_call_operand.vmem [shape: f32[18,96], index: 0, kind: input, shape index: {}]
  %s1 = inlined_call_operand.vmem [shape: s32[18,1], index: 1, kind: input, shape index: {}]
  %s2 = inlined_call_operand.hbm [shape: f32[1,2], index: 2, kind: output, shape index: {}]
  %s3 = sld [smem:[#allocation0]]
  $region18: #{tpu_custom_call.1} parent=0
    _
  %s5 = ssub.s32 1, %s3
  %s6 = scalar_select 0, %s5, %s3
  $region1: #{tpu_custom_call.1} parent=0
    #allocation2 [shape = 'u8[512]{0}', space=smem, size = 0x200, scoped, tag = 'output window, operand 0, single buffered']
    #allocation3 [shape = 's32[1]{0}', space=sflag, size = 0x4, scoped, tag = 'scoped memory for tpu_custom_call.1']
    %7 = vsyncpa [#allocation3], 0
    // Predicated region
    $region2: #{tpu_custom_call.1} parent=1 // pred_check
      _
    $region3: #{tpu_custom_call.1} parent=1 // pred_check_branch
      %9 = sbr.rel (0) target = $region5
    $region4: #{tpu_custom_call.1} parent=1 // pred_region
      _
    $region5: #{tpu_custom_call.1} parent=1 // pred_fallthru
      _
    // Predicated region
    $region6: #{tpu_custom_call.1} parent=1 // pred_check
      _
    $region7: #{tpu_custom_call.1} parent=1 // pred_check_branch
      %11 = sbr.rel (0) target = $region9
    $region8: #{tpu_custom_call.1} parent=1 // pred_region
      _
    $region9: #{tpu_custom_call.1} parent=1 // pred_fallthru
      _
    %v12 = vld [vmem:[%s0] sm:$0xff]
    %v13 = vld [vmem:[%s0 + $0x8] sm:$0xff]
    %v14 = vld [vmem:[%s0 + $0x10] sm:$0x3]
    %v15 = vld [vmem:[%s1] sm:$0xff]
    %v16 = vld [vmem:[%s1 + $0x8] sm:$0xff]
    %v17 = vld [vmem:[%s1 + $0x10] sm:$0x3]
    %v18 = vlaneseq
    %v19 = vshrl.u32 %v18, 7
    %v20 = vadd.s32 %v19, 8
    %v21 = vadd.s32 %v19, 16
    %s22 = smul.u32 0, 18
    %v23 = vstv %s22
    %v24 = vadd.s32 %v23, %v19
    %v25 = vadd.s32 %v23, %v20
    %v26 = vadd.s32 %v23, %v21
    %vm27 = vcmp.lt.s32.totalorder %v24, 18
    %vm28 = vcmp.lt.s32.totalorder %v25, 18
    %vm29 = vcmp.lt.s32.totalorder %v26, 18
    %vm30 = vcmp.ne.s32.totalorder %v15, 92
    %vm31 = vcmp.ne.s32.totalorder %v16, 92
    %vm32 = vcmp.ne.s32.totalorder %v17, 92
    %vm33 = vmand %vm30, %vm27
    %vm34 = vmand %vm31, %vm28
    %vm35 = vmand %vm32, %vm29
    %vm36 = vcmask 785408
    %v37 = vsel %vm36, %v12, -inf
    %38 = vmax.xlane.f32.xlu0 %v37
    %v39 = vpop.xlane.xlu0 %38
    %v40 = vsel %vm36, %v13, -inf
    %41 = vmax.xlane.f32.xlu0 %v40
    %v42 = vpop.xlane.xlu0 %41
    %vm43 = vcmask 779264
    %v44 = vsel %vm43, %v14, -inf
    %45 = vmax.xlane.f32.xlu0 %v44
    %v46 = vpop.xlane.xlu0 %45
    %v47 = vsub.f32 %v12, %v39
    %v48 = vsub.f32 %v13, %v42
    %v49 = vsub.f32 %v14, %v46
    %v50 = vmul.f32 %v47, 1.442695
    %v51 = vpow.pop %v50
    %v52 = vmul.f32 %v48, 1.442695
    %v53 = vpow.pop %v52
    %v54 = vmul.f32 %v49, 1.442695
    %v55 = vpow.pop %v54
    %v56 = vsel %vm36, %v51, 0.0
    %57 = vadd.xlane.f32.xlu0 %v56
    %v58 = vpop.xlane.xlu0 %57
    %v59 = vsel %vm36, %v53, 0.0
    %60 = vadd.xlane.f32.xlu0 %v59
    %v61 = vpop.xlane.xlu0 %60
    %v62 = vsel %vm43, %v55, 0.0
    %63 = vadd.xlane.f32.xlu0 %v62
    %v64 = vpop.xlane.xlu0 %63
    %v65 = vlaneseq
    %v66 = vand.u32 %v65, 127
    %67 = vset.pattern.permute.xlu0 0
    %68 = vperm.xlu0 %67, %v15
    %v69 = vpop.permute.xlu0 %68
    %70 = vset.pattern.permute.xlu0 0
    %71 = vperm.xlu0 %70, %v16
    %v72 = vpop.permute.xlu0 %71
    %73 = vset.pattern.permute.xlu0 0
    %74 = vperm.xlu0 %73, %v17
    %v75 = vpop.permute.xlu0 %74
    %vm76 = vcmp.eq.s32.totalorder %v66, %v69
    %vm77 = vcmp.eq.s32.totalorder %v66, %v72
    %vm78 = vcmp.eq.s32.totalorder %v66, %v75
    %v79 = vsel %vm76, %v47, 0.0
    %v80 = vsel %vm77, %v48, 0.0
    %v81 = vsel %vm78, %v49, 0.0
    %v82 = vsel %vm36, %v79, 0.0
    %83 = vadd.xlane.f32.xlu0 %v82
    %v84 = vpop.xlane.xlu0 %83
    %v85 = vsel %vm36, %v80, 0.0
    %86 = vadd.xlane.f32.xlu0 %v85
    %v87 = vpop.xlane.xlu0 %86
    %v88 = vsel %vm43, %v81, 0.0
    %89 = vadd.xlane.f32.xlu0 %v88
    %v90 = vpop.xlane.xlu0 %89
    %v91 = vlog2.pop %v58
    %v92 = vmul.f32 %v91, 0.6931472
    %v93 = vlog2.pop %v61
    %v94 = vmul.f32 %v93, 0.6931472
    %v95 = vlog2.pop %v64
    %v96 = vmul.f32 %v95, 0.6931472
    %v97 = vsub.f32 %v92, %v84
    %v98 = vsub.f32 %v94, %v87
    %v99 = vsub.f32 %v96, %v90
    %v100 = vsel %vm33, %v97, 0.0
    %v101 = vsel %vm34, %v98, 0.0
    %v102 = vsel %vm35, %v99, 0.0
    %vm103 = vcmask 7168
    %v104 = vsel %vm103, %v100, 0.0
    %v105 = vsel %vm103, %v101, 0.0
    %v106 = vadd.f32 %v104, %v105
    %vm107 = vcmask 1024
    %v108 = vsel %vm107, %v102, 0.0
    %v109 = vadd.f32 %v106, %v108
    %110 = vadd.xlane.f32.xlu0 %v109
    %v111 = vpop.xlane.xlu0 %110
    %v112 = vrot.slane %v111, 4
    %v113 = vadd.f32 %v111, %v112
    %v114 = vrot.slane %v113, 2
    %v115 = vadd.f32 %v113, %v114
    %v116 = vrot.slane %v115, 1
    %v117 = vadd.f32 %v115, %v116
    %s118 = vtos %v117
    %s119 = scalar_lea.smem [#allocation2], 0
    %120 = sst [smem:[%s119]] %s118
    %v121 = vsel %vm33, 1, 0
    %v122 = vsel %vm34, 1, 0
    %v123 = vsel %vm35, 1, 0
    %v124 = vcvt.s32.f32 %v121
    %v125 = vcvt.s32.f32 %v122
    %v126 = vcvt.s32.f32 %v123
    %v127 = vsel %vm103, %v124, 0.0
    %v128 = vsel %vm103, %v125, 0.0
    %v129 = vadd.f32 %v127, %v128
    %v130 = vsel %vm107, %v126, 0.0
    %v131 = vadd.f32 %v129, %v130
    %132 = vadd.xlane.f32.xlu0 %v131
    %v133 = vpop.xlane.xlu0 %132
    %v134 = vrot.slane %v133, 4
    %v135 = vadd.f32 %v133, %v134
    %v136 = vrot.slane %v135, 2
    %v137 = vadd.f32 %v135, %v136
    %v138 = vrot.slane %v137, 1
    %v139 = vadd.f32 %v137, %v138
    %s140 = vtos %v139
    %s141 = scalar_lea.smem [#allocation2], 1
    %142 = sst [smem:[%s141]] %s140
    // Predicated region
    $region10: #{tpu_custom_call.1} parent=1 // pred_check
      _
    $region11: #{tpu_custom_call.1} parent=1 // pred_check_branch
      %144 = sbr.rel (0) target = $region13
    $region12: #{tpu_custom_call.1} parent=1 // pred_region
      %s146 = ssub.s32 16, 16
      %147 = vsyncadd [#allocation3], %s146
      %150 = dma.smem_to_hbm [#allocation2], 16, %s2, [#allocation3]
    $region13: #{tpu_custom_call.1} parent=1 // pred_fallthru
      _
    // Predicated region
    $region14: #{tpu_custom_call.1} parent=1 // pred_check
      _
    $region15: #{tpu_custom_call.1} parent=1 // pred_check_branch
      %152 = sbr.rel (0) target = $region17
    $region16: #{tpu_custom_call.1} parent=1 // pred_region
      %153 = dma.done [#allocation3], 16
    $region17: #{tpu_custom_call.1} parent=1 // pred_fallthru
      _
    %154 = sfence
    %155 = vsyncpa [#allocation3], 1

</llo_original>
